<compile_context>
chip_gen: v7x
topology: tpu7x:2x2x1
jax: 0.10.0
libtpu: 0.0.40
codegen_flags: <defaults>
</compile_context>

<pallas_src>
import jax
import jax.numpy as jnp
from jax.experimental import pallas as pl
from jax.experimental.pallas import tpu as pltpu

EPS = 1e-5  # PyTorch LayerNorm default


def _round_up(x, m):
    return (x + m - 1) // m * m


def _layernorm(h, gamma, beta):
    # LayerNorm over the feature (last / lane) axis, PyTorch semantics:
    # biased variance, eps inside rsqrt.
    mean = jnp.mean(h, axis=-1, keepdims=True)
    centered = h - mean
    var = jnp.mean(centered * centered, axis=-1, keepdims=True)
    inv = jax.lax.rsqrt(var + EPS)
    return centered * inv * gamma + beta


def mlp_kernel(x_ref,
               w1_ref, v1_ref,
               w2_ref, v2_ref,
               wo_ref, bo_ref,
               o_ref):
    # x_ref: (batch_tile, D_in) -- batch on sublanes, features on lanes.
    # v*_ref: (3, H) packed rows [bias, ln_gamma, ln_beta].
    x = x_ref[...]

    # layer 1: Linear -> LayerNorm -> ReLU
    h = jnp.dot(x, w1_ref[...], preferred_element_type=jnp.float32) + v1_ref[0:1, :]
    h = _layernorm(h, v1_ref[1:2, :], v1_ref[2:3, :])
    h = jnp.maximum(h, 0.0)

    # layer 2: Linear -> LayerNorm -> ReLU
    h = jnp.dot(h, w2_ref[...], preferred_element_type=jnp.float32) + v2_ref[0:1, :]
    h = _layernorm(h, v2_ref[1:2, :], v2_ref[2:3, :])
    h = jnp.maximum(h, 0.0)

    # out_layer: Linear
    o_ref[...] = (jnp.dot(h, wo_ref[...], preferred_element_type=jnp.float32)
                  + bo_ref[...]).astype(o_ref.dtype)


def mlp_forward(x, params, *, batch_tile=1024):
    """x: (..., D_in) f32. params: PyTorch-layout weights (see init_params)."""
    (w1, b1, g1, be1, w2, b2, g2, be2, wo, bo) = params
    lead_shape = x.shape[:-1]
    D_in = x.shape[-1]
    x2 = x.reshape(-1, D_in)
    B = x2.shape[0]
    H1 = w1.shape[1]
    H2 = w2.shape[1]
    D_out = wo.shape[1]

    # Batch tile: multiple of 8 (sublane granularity), no larger than the
    # (padded) batch. Small batches run in a single grid step; large batches
    # get multiple "parallel" steps for multi-core sharding.
    bt = min(_round_up(batch_tile, 8), _round_up(B, 8))
    B_pad = _round_up(B, bt)
    if B_pad != B:
        # Zero rows pass safely through LayerNorm (var=0 -> rsqrt(eps)) and are
        # sliced away below.
        x2 = jnp.pad(x2, ((0, B_pad - B), (0, 0)))

    # Pack (bias, gamma, beta) per hidden layer into one resident operand.
    v1 = jnp.concatenate([b1, g1, be1], axis=0)   # (3, H1)
    v2 = jnp.concatenate([b2, g2, be2], axis=0)   # (3, H2)

    resident = lambda shape: pl.BlockSpec(shape, lambda i: (0, 0))

    grid_spec = pltpu.PrefetchScalarGridSpec(
        num_scalar_prefetch=0,
        grid=(B_pad // bt,),
        in_specs=[
            pl.BlockSpec((bt, D_in), lambda i: (i, 0)),          # x tile
            resident((D_in, H1)), resident((3, H1)),
            resident((H1, H2)), resident((3, H2)),
            resident((H2, D_out)), resident((1, D_out)),
        ],
        out_specs=pl.BlockSpec((bt, D_out), lambda i: (i, 0)),
    )

    out = pl.pallas_call(
        mlp_kernel,
        out_shape=jax.ShapeDtypeStruct((B_pad, D_out), jnp.float32),
        grid_spec=grid_spec,
        compiler_params=pltpu.CompilerParams(
            dimension_semantics=("parallel",)),
    )(x2, w1, v1, w2, v2, wo, bo)

    out = out[:B]
    return out.reshape(lead_shape + (D_out,))


def init_params(key, d_in, h1, h2, d_out):
    def glorot(key, fan_in, fan_out):
        limit = (6.0 / (fan_in + fan_out)) ** 0.5
        return jax.random.uniform(key, (fan_in, fan_out), jnp.float32,
                                  minval=-limit, maxval=limit)

    ks = jax.random.split(key, 6)
    w1 = glorot(ks[0], d_in, h1)
    b1 = jnp.zeros((1, h1), jnp.float32)
    g1 = jnp.ones((1, h1), jnp.float32)       # LayerNorm weight
    be1 = jnp.zeros((1, h1), jnp.float32)     # LayerNorm bias
    w2 = glorot(ks[1], h1, h2)
    b2 = jnp.zeros((1, h2), jnp.float32)
    g2 = jnp.ones((1, h2), jnp.float32)
    be2 = jnp.zeros((1, h2), jnp.float32)
    wo = glorot(ks[2], h2, d_out)
    bo = jnp.zeros((1, d_out), jnp.float32)
    return (w1, b1, g1, be1, w2, b2, g2, be2, wo, bo)


def mlp_reference(x, params):
    (w1, b1, g1, be1, w2, b2, g2, be2, wo, bo) = params
    h = x @ w1 + b1
    h = _layernorm(h, g1, be1)
    h = jnp.maximum(h, 0.0)
    h = h @ w2 + b2
    h = _layernorm(h, g2, be2)
    h = jnp.maximum(h, 0.0)
    return h @ wo + bo


if __name__ == "__main__":
    key = jax.random.PRNGKey(0)
    k_x, k_p = jax.random.split(key)

    B, D_IN, H1, H2, D_OUT = 16, 16, 32, 32, 8
    x = jax.random.normal(k_x, (B, D_IN), jnp.float32)
    params = init_params(k_p, D_IN, H1, H2, D_OUT)

    out = mlp_forward(x, params)
    out = jax.block_until_ready(out)

    ref = mlp_reference(x, params)
    assert out.shape == (B, D_OUT)
    assert jnp.allclose(out, ref, atol=1e-5, rtol=1e-5), (
        float(jnp.max(jnp.abs(out - ref))))

    print("KERNEL_OK")
</pallas_src>

<mosaic_0001>
module attributes {stable_mosaic.version = 11 : i64} {
  func.func @mlp_kernel(%arg0: i32, %arg1: memref<16x16xf32, #tpu.memory_space<vmem>>, %arg2: memref<16x32xf32, #tpu.memory_space<vmem>>, %arg3: memref<3x32xf32, #tpu.memory_space<vmem>>, %arg4: memref<32x32xf32, #tpu.memory_space<vmem>>, %arg5: memref<3x32xf32, #tpu.memory_space<vmem>>, %arg6: memref<32x8xf32, #tpu.memory_space<vmem>>, %arg7: memref<1x8xf32, #tpu.memory_space<vmem>>, %arg8: memref<16x8xf32, #tpu.memory_space<vmem>>) attributes {dimension_semantics = [#tpu.dimension_semantics<parallel>], iteration_bounds = array<i64: 1>, scalar_prefetch = 0 : i64, scratch_operands = 0 : i64, tpu.core_type = #tpu.core_type<tc>, window_params = [{transform_indices = @transform_0, window_bounds = array<i64: 16, 16>}, {pipeline_mode = #tpu.pipeline_mode<synchronous>, transform_indices = @transform_1, window_bounds = array<i64: 16, 32>}, {pipeline_mode = #tpu.pipeline_mode<synchronous>, transform_indices = @transform_2, window_bounds = array<i64: 3, 32>}, {pipeline_mode = #tpu.pipeline_mode<synchronous>, transform_indices = @transform_3, window_bounds = array<i64: 32, 32>}, {pipeline_mode = #tpu.pipeline_mode<synchronous>, transform_indices = @transform_4, window_bounds = array<i64: 3, 32>}, {pipeline_mode = #tpu.pipeline_mode<synchronous>, transform_indices = @transform_5, window_bounds = array<i64: 32, 8>}, {pipeline_mode = #tpu.pipeline_mode<synchronous>, transform_indices = @transform_6, window_bounds = array<i64: 1, 8>}, {transform_indices = @transform_7, window_bounds = array<i64: 16, 8>}]} {
    %c0 = arith.constant 0 : index
    %c0_0 = arith.constant 0 : index
    %0 = vector.load %arg1[%c0, %c0_0] : memref<16x16xf32, #tpu.memory_space<vmem>>, vector<16x16xf32>
    %c0_1 = arith.constant 0 : index
    %c0_2 = arith.constant 0 : index
    %1 = vector.load %arg2[%c0_1, %c0_2] : memref<16x32xf32, #tpu.memory_space<vmem>>, vector<16x32xf32>
    %cst = arith.constant dense<0.000000e+00> : vector<16x32xf32>
    %2 = tpu.matmul %0, %1, %cst {dimension_numbers = #tpu.dot_dimension_numbers<[1], [0], [0], [1], [0, 0, 1, 1], [], []>} : vector<16x16xf32>, vector<16x32xf32>, vector<16x32xf32> -> vector<16x32xf32>
    %c0_3 = arith.constant 0 : index
    %c0_4 = arith.constant 0 : index
    %3 = vector.load %arg3[%c0_3, %c0_4] : memref<3x32xf32, #tpu.memory_space<vmem>>, vector<1x32xf32>
    %4 = vector.broadcast %3 : vector<1x32xf32> to vector<16x32xf32>
    %5 = arith.addf %2, %4 : vector<16x32xf32>
    %c1 = arith.constant 1 : index
    %c0_5 = arith.constant 0 : index
    %6 = vector.load %arg3[%c1, %c0_5] : memref<3x32xf32, #tpu.memory_space<vmem>>, vector<1x32xf32>
    %c2 = arith.constant 2 : index
    %c0_6 = arith.constant 0 : index
    %7 = vector.load %arg3[%c2, %c0_6] : memref<3x32xf32, #tpu.memory_space<vmem>>, vector<1x32xf32>
    %cst_7 = arith.constant dense<0.000000e+00> : vector<16xf32>
    %8 = vector.multi_reduction <add>, %5, %cst_7 [1] : vector<16x32xf32> to vector<16xf32>
    %9 = vector.shape_cast %8 : vector<16xf32> to vector<16x1xf32>
    %cst_8 = arith.constant 3.200000e+01 : f32
    %10 = vector.broadcast %cst_8 : f32 to vector<16x1xf32>
    %11 = arith.divf %9, %10 : vector<16x1xf32>
    %12 = vector.broadcast %11 : vector<16x1xf32> to vector<16x32xf32>
    %13 = arith.subf %5, %12 : vector<16x32xf32>
    %14 = arith.mulf %13, %13 : vector<16x32xf32>
    %cst_9 = arith.constant dense<0.000000e+00> : vector<16xf32>
    %15 = vector.multi_reduction <add>, %14, %cst_9 [1] : vector<16x32xf32> to vector<16xf32>
    %16 = vector.shape_cast %15 : vector<16xf32> to vector<16x1xf32>
    %cst_10 = arith.constant 3.200000e+01 : f32
    %17 = vector.broadcast %cst_10 : f32 to vector<16x1xf32>
    %18 = arith.divf %16, %17 : vector<16x1xf32>
    %cst_11 = arith.constant 9.99999974E-6 : f32
    %19 = vector.broadcast %cst_11 : f32 to vector<16x1xf32>
    %20 = arith.addf %18, %19 : vector<16x1xf32>
    %21 = math.rsqrt %20 : vector<16x1xf32>
    %22 = vector.broadcast %21 : vector<16x1xf32> to vector<16x32xf32>
    %23 = arith.mulf %13, %22 : vector<16x32xf32>
    %24 = vector.broadcast %6 : vector<1x32xf32> to vector<16x32xf32>
    %25 = arith.mulf %23, %24 : vector<16x32xf32>
    %26 = vector.broadcast %7 : vector<1x32xf32> to vector<16x32xf32>
    %27 = arith.addf %25, %26 : vector<16x32xf32>
    %cst_12 = arith.constant 0.000000e+00 : f32
    %28 = vector.broadcast %cst_12 : f32 to vector<16x32xf32>
    %29 = arith.maximumf %27, %28 : vector<16x32xf32>
    %c0_13 = arith.constant 0 : index
    %c0_14 = arith.constant 0 : index
    %30 = vector.load %arg4[%c0_13, %c0_14] : memref<32x32xf32, #tpu.memory_space<vmem>>, vector<32x32xf32>
    %cst_15 = arith.constant dense<0.000000e+00> : vector<16x32xf32>
    %31 = tpu.matmul %29, %30, %cst_15 {dimension_numbers = #tpu.dot_dimension_numbers<[1], [0], [0], [1], [0, 0, 1, 1], [], []>} : vector<16x32xf32>, vector<32x32xf32>, vector<16x32xf32> -> vector<16x32xf32>
    %c0_16 = arith.constant 0 : index
    %c0_17 = arith.constant 0 : index
    %32 = vector.load %arg5[%c0_16, %c0_17] : memref<3x32xf32, #tpu.memory_space<vmem>>, vector<1x32xf32>
    %33 = vector.broadcast %32 : vector<1x32xf32> to vector<16x32xf32>
    %34 = arith.addf %31, %33 : vector<16x32xf32>
    %c1_18 = arith.constant 1 : index
    %c0_19 = arith.constant 0 : index
    %35 = vector.load %arg5[%c1_18, %c0_19] : memref<3x32xf32, #tpu.memory_space<vmem>>, vector<1x32xf32>
    %c2_20 = arith.constant 2 : index
    %c0_21 = arith.constant 0 : index
    %36 = vector.load %arg5[%c2_20, %c0_21] : memref<3x32xf32, #tpu.memory_space<vmem>>, vector<1x32xf32>
    %cst_22 = arith.constant dense<0.000000e+00> : vector<16xf32>
    %37 = vector.multi_reduction <add>, %34, %cst_22 [1] : vector<16x32xf32> to vector<16xf32>
    %38 = vector.shape_cast %37 : vector<16xf32> to vector<16x1xf32>
    %cst_23 = arith.constant 3.200000e+01 : f32
    %39 = vector.broadcast %cst_23 : f32 to vector<16x1xf32>
    %40 = arith.divf %38, %39 : vector<16x1xf32>
    %41 = vector.broadcast %40 : vector<16x1xf32> to vector<16x32xf32>
    %42 = arith.subf %34, %41 : vector<16x32xf32>
    %43 = arith.mulf %42, %42 : vector<16x32xf32>
    %cst_24 = arith.constant dense<0.000000e+00> : vector<16xf32>
    %44 = vector.multi_reduction <add>, %43, %cst_24 [1] : vector<16x32xf32> to vector<16xf32>
    %45 = vector.shape_cast %44 : vector<16xf32> to vector<16x1xf32>
    %cst_25 = arith.constant 3.200000e+01 : f32
    %46 = vector.broadcast %cst_25 : f32 to vector<16x1xf32>
    %47 = arith.divf %45, %46 : vector<16x1xf32>
    %cst_26 = arith.constant 9.99999974E-6 : f32
    %48 = vector.broadcast %cst_26 : f32 to vector<16x1xf32>
    %49 = arith.addf %47, %48 : vector<16x1xf32>
    %50 = math.rsqrt %49 : vector<16x1xf32>
    %51 = vector.broadcast %50 : vector<16x1xf32> to vector<16x32xf32>
    %52 = arith.mulf %42, %51 : vector<16x32xf32>
    %53 = vector.broadcast %35 : vector<1x32xf32> to vector<16x32xf32>
    %54 = arith.mulf %52, %53 : vector<16x32xf32>
    %55 = vector.broadcast %36 : vector<1x32xf32> to vector<16x32xf32>
    %56 = arith.addf %54, %55 : vector<16x32xf32>
    %cst_27 = arith.constant 0.000000e+00 : f32
    %57 = vector.broadcast %cst_27 : f32 to vector<16x32xf32>
    %58 = arith.maximumf %56, %57 : vector<16x32xf32>
    %c0_28 = arith.constant 0 : index
    %c0_29 = arith.constant 0 : index
    %59 = vector.load %arg6[%c0_28, %c0_29] : memref<32x8xf32, #tpu.memory_space<vmem>>, vector<32x8xf32>
    %cst_30 = arith.constant dense<0.000000e+00> : vector<16x8xf32>
    %60 = tpu.matmul %58, %59, %cst_30 {dimension_numbers = #tpu.dot_dimension_numbers<[1], [0], [0], [1], [0, 0, 1, 1], [], []>} : vector<16x32xf32>, vector<32x8xf32>, vector<16x8xf32> -> vector<16x8xf32>
    %c0_31 = arith.constant 0 : index
    %c0_32 = arith.constant 0 : index
    %61 = vector.load %arg7[%c0_31, %c0_32] : memref<1x8xf32, #tpu.memory_space<vmem>>, vector<1x8xf32>
    %62 = vector.broadcast %61 : vector<1x8xf32> to vector<16x8xf32>
    %63 = arith.addf %60, %62 : vector<16x8xf32>
    %c0_33 = arith.constant 0 : index
    %c0_34 = arith.constant 0 : index
    %64 = vector.load %arg8[%c0_33, %c0_34] : memref<16x8xf32, #tpu.memory_space<vmem>>, vector<16x8xf32>
    tpu.vector_store %arg8[%c0_33, %c0_34], %63 {strides = array<i32>} : memref<16x8xf32, #tpu.memory_space<vmem>>, vector<16x8xf32>,
    return
  }
  func.func @transform_0(%arg0: i32) -> (i32, i32) {
    %c0_i32 = arith.constant 0 : i32
    %c0_i32_0 = arith.constant 0 : i32
    return %arg0, %c0_i32 : i32, i32
  }
  func.func @transform_1(%arg0: i32) -> (i32, i32) {
    %c0_i32 = arith.constant 0 : i32
    %c0_i32_0 = arith.constant 0 : i32
    %c0_i32_1 = arith.constant 0 : i32
    return %c0_i32, %c0_i32_0 : i32, i32
  }
  func.func @transform_2(%arg0: i32) -> (i32, i32) {
    %c0_i32 = arith.constant 0 : i32
    %c0_i32_0 = arith.constant 0 : i32
    %c0_i32_1 = arith.constant 0 : i32
    return %c0_i32, %c0_i32_0 : i32, i32
  }
  func.func @transform_3(%arg0: i32) -> (i32, i32) {
    %c0_i32 = arith.constant 0 : i32
    %c0_i32_0 = arith.constant 0 : i32
    %c0_i32_1 = arith.constant 0 : i32
    return %c0_i32, %c0_i32_0 : i32, i32
  }
  func.func @transform_4(%arg0: i32) -> (i32, i32) {
    %c0_i32 = arith.constant 0 : i32
    %c0_i32_0 = arith.constant 0 : i32
    %c0_i32_1 = arith.constant 0 : i32
    return %c0_i32, %c0_i32_0 : i32, i32
  }
  func.func @transform_5(%arg0: i32) -> (i32, i32) {
    %c0_i32 = arith.constant 0 : i32
    %c0_i32_0 = arith.constant 0 : i32
    %c0_i32_1 = arith.constant 0 : i32
    return %c0_i32, %c0_i32_0 : i32, i32
  }
  func.func @transform_6(%arg0: i32) -> (i32, i32) {
    %c0_i32 = arith.constant 0 : i32
    %c0_i32_0 = arith.constant 0 : i32
    %c0_i32_1 = arith.constant 0 : i32
    return %c0_i32, %c0_i32_0 : i32, i32
  }
  func.func @transform_7(%arg0: i32) -> (i32, i32) {
    %c0_i32 = arith.constant 0 : i32
    %c0_i32_0 = arith.constant 0 : i32
    return %arg0, %c0_i32 : i32, i32
  }
}

</mosaic_0001>

<llo_original>
// kernel: tpu_custom_call.1
$region0: #{tpu_custom_call.1}
  #allocation0 [shape = 'u32[]', space=smem, size = 0x4, offset = 0x4, fixed_abs, tag = 'smem constant byte address 0x4 - core index']
  #allocation1 [shape = 'u32[144,128]{1,0:T(1,128)}', space=vmem, size = 0x12000, scoped, tag = 'internal scratch']
  %s0 = inlined_call_operand.vmem [shape: f32[16,16], index: 0, kind: input, shape index: {}]
  %s1 = inlined_call_operand.hbm [shape: f32[16,32], index: 1, kind: input, shape index: {}]
  %s2 = inlined_call_operand.hbm [shape: f32[3,32], index: 2, kind: input, shape index: {}]
  %s3 = inlined_call_operand.vmem [shape: f32[32,32], index: 3, kind: input, shape index: {}]
  %s4 = inlined_call_operand.hbm [shape: f32[3,32], index: 4, kind: input, shape index: {}]
  %s5 = inlined_call_operand.vmem [shape: f32[32,8], index: 5, kind: input, shape index: {}]
  %s6 = inlined_call_operand.vmem [shape: f32[1,8], index: 6, kind: input, shape index: {}]
  %s7 = inlined_call_operand.vmem [shape: f32[16,8], index: 7, kind: output, shape index: {}]
  %s8 = sld [smem:[#allocation0]]
  $region50: #{tpu_custom_call.1} parent=0
    _
  %s10 = ssub.s32 1, %s8
  %s11 = scalar_select 0, %s10, %s8
  $region1: #{tpu_custom_call.1} parent=0
    #allocation2 [shape = 'u8[8192]{0}', space=vmem, size = 0x2000, scoped, tag = 'input window, operand 1, single buffered']
    #allocation3 [shape = 's32[1]{0}', space=sflag, size = 0x4, scoped, tag = 'scoped memory for tpu_custom_call.1']
    #allocation4 [shape = 'u8[2048]{0}', space=vmem, size = 0x800, scoped, tag = 'input window, operand 2, single buffered']
    #allocation5 [shape = 's32[1]{0}', space=sflag, size = 0x4, scoped, tag = 'scoped memory for tpu_custom_call.1']
    #allocation6 [shape = 'u8[2048]{0}', space=vmem, size = 0x800, scoped, tag = 'input window, operand 4, single buffered']
    %12 = vsyncpa [#allocation3], 0
    %13 = vsyncpa [#allocation5], 0
    // Predicated region
    $region2: #{tpu_custom_call.1} parent=1 // pred_check
      _
    $region3: #{tpu_custom_call.1} parent=1 // pred_check_branch
      %15 = sbr.rel (0) target = $region5
    $region4: #{tpu_custom_call.1} parent=1 // pred_region
      _
    $region5: #{tpu_custom_call.1} parent=1 // pred_fallthru
      _
    // Predicated region
    $region6: #{tpu_custom_call.1} parent=1 // pred_check
      _
    $region7: #{tpu_custom_call.1} parent=1 // pred_check_branch
      %17 = sbr.rel (0) target = $region9
    $region8: #{tpu_custom_call.1} parent=1 // pred_region
      %s19 = ssub.s32 256, 256
      %20 = vsyncadd [#allocation3], %s19
      %s21 = sshll.u32 [#allocation2], 4
      %s22 = int_to_ptr.vmem [resolvable:$true] %s21
      %27 = dma.hbm_to_vmem [thread:$0]  %s1, 256, %s22, [#allocation3], 128, 128, 8
    $region9: #{tpu_custom_call.1} parent=1 // pred_fallthru
      _
    // Predicated region
    $region10: #{tpu_custom_call.1} parent=1 // pred_check
      _
    $region11: #{tpu_custom_call.1} parent=1 // pred_check_branch
      %29 = sbr.rel (0) target = $region13
    $region12: #{tpu_custom_call.1} parent=1 // pred_region
      %s31 = ssub.s32 64, 64
      %32 = vsyncadd [#allocation5], %s31
      %s34 = sshll.u32 [#allocation4], 4
      %s35 = int_to_ptr.vmem [resolvable:$true] %s34
      %37 = dma.hbm_to_vmem [thread:$0]  %s2, 64, %s35, [#allocation5]
    $region13: #{tpu_custom_call.1} parent=1 // pred_fallthru
      _
    // Predicated region
    $region14: #{tpu_custom_call.1} parent=1 // pred_check
      _
    $region15: #{tpu_custom_call.1} parent=1 // pred_check_branch
      %39 = sbr.rel (0) target = $region17
    $region16: #{tpu_custom_call.1} parent=1 // pred_region
      _
    $region17: #{tpu_custom_call.1} parent=1 // pred_fallthru
      _
    // Predicated region
    $region18: #{tpu_custom_call.1} parent=1 // pred_check
      _
    $region19: #{tpu_custom_call.1} parent=1 // pred_check_branch
      %41 = sbr.rel (0) target = $region21
    $region20: #{tpu_custom_call.1} parent=1 // pred_region
      %s43 = ssub.s32 64, 64
      %44 = vsyncadd [#allocation5], %s43
      %s46 = sshll.u32 [#allocation6], 4
      %s47 = int_to_ptr.vmem [resolvable:$true] %s46
      %49 = dma.hbm_to_vmem [thread:$0]  %s4, 64, %s47, [#allocation5]
    $region21: #{tpu_custom_call.1} parent=1 // pred_fallthru
      _
    // Predicated region
    $region22: #{tpu_custom_call.1} parent=1 // pred_check
      _
    $region23: #{tpu_custom_call.1} parent=1 // pred_check_branch
      %51 = sbr.rel (0) target = $region25
    $region24: #{tpu_custom_call.1} parent=1 // pred_region
      _
    $region25: #{tpu_custom_call.1} parent=1 // pred_fallthru
      _
    // Predicated region
    $region26: #{tpu_custom_call.1} parent=1 // pred_check
      _
    $region27: #{tpu_custom_call.1} parent=1 // pred_check_branch
      %53 = sbr.rel (0) target = $region29
    $region28: #{tpu_custom_call.1} parent=1 // pred_region
      _
    $region29: #{tpu_custom_call.1} parent=1 // pred_fallthru
      _
    // Predicated region
    $region30: #{tpu_custom_call.1} parent=1 // pred_check
      _
    $region31: #{tpu_custom_call.1} parent=1 // pred_check_branch
      %55 = sbr.rel (0) target = $region33
    $region32: #{tpu_custom_call.1} parent=1 // pred_region
      %56 = dma.done [#allocation3], 256
    $region33: #{tpu_custom_call.1} parent=1 // pred_fallthru
      _
    // Predicated region
    $region34: #{tpu_custom_call.1} parent=1 // pred_check
      _
    $region35: #{tpu_custom_call.1} parent=1 // pred_check_branch
      %58 = sbr.rel (0) target = $region37
    $region36: #{tpu_custom_call.1} parent=1 // pred_region
      %59 = dma.done [#allocation5], 64
    $region37: #{tpu_custom_call.1} parent=1 // pred_fallthru
      _
    // Predicated region
    $region38: #{tpu_custom_call.1} parent=1 // pred_check
      _
    $region39: #{tpu_custom_call.1} parent=1 // pred_check_branch
      %61 = sbr.rel (0) target = $region41
    $region40: #{tpu_custom_call.1} parent=1 // pred_region
      %62 = dma.done [#allocation5], 64
    $region41: #{tpu_custom_call.1} parent=1 // pred_fallthru
      _
    %v63 = vld [vmem:[%s0] sm:$0xff]
    %v64 = vld [vmem:[%s0 + $0x8] sm:$0xff]
    %v65 = vld [vmem:[#allocation2] sm:$0xff]
    %v66 = vld [vmem:[#allocation2 + $0x8] sm:$0xff]
    %v67 = vld [vmem:[#allocation4] sm:$0x1]
    %v68 = vlaneseq
    %v69 = vshrl.u32 %v68, 7
    %v70 = vsub.s32 0, %v69
    %v71 = vrot.slane %v67, %v70
    %vm72 = vcmask 130048
    %v74 = vsel %vm72, %v63, 0
    %v77 = vsel %vm72, %v64, 0
    %79 = vmatprep.subr.mxu0 0.0
    %80 = vmatpush1.msra.mxu0 %v65
    %81 = vmatprep.subr.mxu0 0.0
    %82 = vmatpush1.msra.mxu0 %v66
    %83 = vmatprep.subr.mxu0 0.0
    %84 = vmatpush1.msra.mxu0 0.0
    %85 = vmatprep.subr.mxu0 0.0
    %86 = vmatpush1.msra.mxu0 0.0
    %87 = vmatprep.subr.mxu0 0.0
    %88 = vmatpush1.msra.mxu0 0.0
    %89 = vmatprep.subr.mxu0 0.0
    %90 = vmatpush1.msra.mxu0 0.0
    %91 = vmatprep.subr.mxu0 0.0
    %92 = vmatpush1.msra.mxu0 0.0
    %93 = vmatprep.subr.mxu0 0.0
    %94 = vmatpush1.msra.mxu0 0.0
    %95 = vmatprep.subr.mxu0 0.0
    %96 = vmatpush1.msra.mxu0 0.0
    %97 = vmatprep.subr.mxu0 0.0
    %98 = vmatpush1.msra.mxu0 0.0
    %99 = vmatprep.subr.mxu0 0.0
    %100 = vmatpush1.msra.mxu0 0.0
    %101 = vmatprep.subr.mxu0 0.0
    %102 = vmatpush1.msra.mxu0 0.0
    %103 = vmatprep.subr.mxu0 0.0
    %104 = vmatpush1.msra.mxu0 0.0
    %105 = vmatprep.subr.mxu0 0.0
    %106 = vmatpush1.msra.mxu0 0.0
    %107 = vmatprep.subr.mxu0 0.0
    %108 = vmatpush1.msra.mxu0 0.0
    %109 = vmatprep.subr.mxu0 0.0
    %110 = vmatpush1.msra.mxu0 0.0
    %111 = vmatprep.subr.mxu0 0.0
    %112 = vmatpush1.msra.mxu0 0.0
    %113 = vmatprep.subr.mxu0 0.0
    %114 = vmatpush1.msra.mxu0 0.0
    %115 = vmatprep.subr.mxu0 0.0
    %116 = vmatpush1.msra.mxu0 0.0
    %117 = vmatprep.subr.mxu0 0.0
    %118 = vmatpush1.msra.mxu0 0.0
    %119 = vmatprep.subr.mxu0 0.0
    %120 = vmatpush1.msra.mxu0 0.0
    %121 = vmatprep.subr.mxu0 0.0
    %122 = vmatpush1.msra.mxu0 0.0
    %123 = vmatprep.subr.mxu0 0.0
    %124 = vmatpush1.msra.mxu0 0.0
    %125 = vmatprep.subr.mxu0 0.0
    %126 = vmatpush1.msra.mxu0 0.0
    %127 = vmatprep.subr.mxu0 0.0
    %128 = vmatpush1.msra.mxu0 0.0
    %129 = vmatprep.subr.mxu0 0.0
    %130 = vmatpush1.msra.mxu0 0.0
    %131 = vmatprep.subr.mxu0 0.0
    %132 = vmatpush1.msra.mxu0 0.0
    %133 = vmatprep.subr.mxu0 0.0
    %134 = vmatpush1.msra.mxu0 0.0
    %135 = vmatprep.subr.mxu0 0.0
    %136 = vmatpush1.msra.mxu0 0.0
    %137 = vmatprep.subr.mxu0 0.0
    %138 = vmatpush1.msra.mxu0 0.0
    %139 = vmatprep.subr.mxu0 0.0
    %140 = vmatpush1.msra.mxu0 0.0
    %141 = vmatprep.subr.mxu0 0.0
    %142 = vmatpush1.msra.mxu0 0.0
    %143 = vmatprep.mubr.f32.mxu0 0.0
    %144 = vmatmul.mubr.f32.gmra.mrb[0].mxu0 %v74
    %v145 = vpop.f32.mrb[0].mxu0
    %v146 = vadd.f32 %v71, %v145
    %v147 = vpop.f32.mrb[0].mxu0
    %148 = vmatprep.mubr.f32.mxu0 0.0
    %149 = vmatmul.mubr.f32.gmra.mrb[0].mxu0 %v77
    %v150 = vpop.f32.mrb[0].mxu0
    %v151 = vadd.f32 %v71, %v150
    %v152 = vpop.f32.mrb[0].mxu0
    %153 = vdwg.mxu0
    %v154 = vld [vmem:[#allocation4 + $0x1] sm:$0x1]
    %v155 = vld [vmem:[#allocation4 + $0x2] sm:$0x1]
    %vm156 = vcmask 261120
    %v157 = vsel %vm156, %v146, 0.0
    %158 = vadd.xlane.f32.xlu0 %v157
    %v159 = vpop.xlane.xlu0 %158
    %v160 = vsel %vm156, %v151, 0.0
    %161 = vadd.xlane.f32.xlu0 %v160
    %v162 = vpop.xlane.xlu0 %161
    %v163 = vrcp.pop 32.0
    %v164 = vmul.f32 %v159, %v163
    %v165 = vmul.f32 %v162, %v163
    %v166 = vsub.f32 %v146, %v164
    %v167 = vsub.f32 %v151, %v165
    %v168 = vmul.f32 %v166, %v166
    %v169 = vmul.f32 %v167, %v167
    %v170 = vsel %vm156, %v168, 0.0
    %171 = vadd.xlane.f32.xlu0 %v170
    %v172 = vpop.xlane.xlu0 %171
    %v173 = vsel %vm156, %v169, 0.0
    %174 = vadd.xlane.f32.xlu0 %v173
    %v175 = vpop.xlane.xlu0 %174
    %v176 = vmul.f32 %v172, %v163
    %v177 = vmul.f32 %v175, %v163
    %v178 = vadd.f32 %v176, 1e-05
    %v179 = vadd.f32 %v177, 1e-05
    %v180 = vrsqrt.pop %v178
    %v181 = vrsqrt.pop %v179
    %v182 = vmul.f32 %v166, %v180
    %v183 = vmul.f32 %v167, %v181
    %v184 = vlaneseq
    %v185 = vshrl.u32 %v184, 7
    %v186 = vsub.s32 0, %v185
    %v187 = vrot.slane %v154, %v186
    %v188 = vmul.f32 %v182, %v187
    %v189 = vmul.f32 %v183, %v187
    %v190 = vlaneseq
    %v191 = vshrl.u32 %v190, 7
    %v192 = vsub.s32 0, %v191
    %v193 = vrot.slane %v155, %v192
    %v194 = vadd.f32 %v188, %v193
    %v195 = vadd.f32 %v189, %v193
    %v196 = vmax.f32 %v194, 0.0
    %v197 = vmax.f32 %v195, 0.0
    %v198 = vld [vmem:[%s3] sm:$0xff]
    %v199 = vld [vmem:[%s3 + $0x8] sm:$0xff]
    %v200 = vld [vmem:[%s3 + $0x10] sm:$0xff]
    %v201 = vld [vmem:[%s3 + $0x18] sm:$0xff]
    %v202 = vld [vmem:[#allocation6] sm:$0x1]
    %v203 = vlaneseq
    %v204 = vshrl.u32 %v203, 7
    %v205 = vsub.s32 0, %v204
    %v206 = vrot.slane %v202, %v205
    %v208 = vsel %vm156, %v196, 0
    %v211 = vsel %vm156, %v197, 0
    %213 = vmatprep.subr.mxu0 0.0
    %214 = vmatpush1.msra.mxu0 %v198
    %215 = vmatprep.subr.mxu0 0.0
    %216 = vmatpush1.msra.mxu0 %v199
    %217 = vmatprep.subr.mxu0 0.0
    %218 = vmatpush1.msra.mxu0 %v200
    %219 = vmatprep.subr.mxu0 0.0
    %220 = vmatpush1.msra.mxu0 %v201
    %221 = vmatprep.subr.mxu0 0.0
    %222 = vmatpush1.msra.mxu0 0.0
    %223 = vmatprep.subr.mxu0 0.0
    %224 = vmatpush1.msra.mxu0 0.0
    %225 = vmatprep.subr.mxu0 0.0
    %226 = vmatpush1.msra.mxu0 0.0
    %227 = vmatprep.subr.mxu0 0.0
    %228 = vmatpush1.msra.mxu0 0.0
    %229 = vmatprep.subr.mxu0 0.0
    %230 = vmatpush1.msra.mxu0 0.0
    %231 = vmatprep.subr.mxu0 0.0
    %232 = vmatpush1.msra.mxu0 0.0
    %233 = vmatprep.subr.mxu0 0.0
    %234 = vmatpush1.msra.mxu0 0.0
    %235 = vmatprep.subr.mxu0 0.0
    %236 = vmatpush1.msra.mxu0 0.0
    %237 = vmatprep.subr.mxu0 0.0
    %238 = vmatpush1.msra.mxu0 0.0
    %239 = vmatprep.subr.mxu0 0.0
    %240 = vmatpush1.msra.mxu0 0.0
    %241 = vmatprep.subr.mxu0 0.0
    %242 = vmatpush1.msra.mxu0 0.0
    %243 = vmatprep.subr.mxu0 0.0
    %244 = vmatpush1.msra.mxu0 0.0
    %245 = vmatprep.subr.mxu0 0.0
    %246 = vmatpush1.msra.mxu0 0.0
    %247 = vmatprep.subr.mxu0 0.0
    %248 = vmatpush1.msra.mxu0 0.0
    %249 = vmatprep.subr.mxu0 0.0
    %250 = vmatpush1.msra.mxu0 0.0
    %251 = vmatprep.subr.mxu0 0.0
    %252 = vmatpush1.msra.mxu0 0.0
    %253 = vmatprep.subr.mxu0 0.0
    %254 = vmatpush1.msra.mxu0 0.0
    %255 = vmatprep.subr.mxu0 0.0
    %256 = vmatpush1.msra.mxu0 0.0
    %257 = vmatprep.subr.mxu0 0.0
    %258 = vmatpush1.msra.mxu0 0.0
    %259 = vmatprep.subr.mxu0 0.0
    %260 = vmatpush1.msra.mxu0 0.0
    %261 = vmatprep.subr.mxu0 0.0
    %262 = vmatpush1.msra.mxu0 0.0
    %263 = vmatprep.subr.mxu0 0.0
    %264 = vmatpush1.msra.mxu0 0.0
    %265 = vmatprep.subr.mxu0 0.0
    %266 = vmatpush1.msra.mxu0 0.0
    %267 = vmatprep.subr.mxu0 0.0
    %268 = vmatpush1.msra.mxu0 0.0
    %269 = vmatprep.subr.mxu0 0.0
    %270 = vmatpush1.msra.mxu0 0.0
    %271 = vmatprep.subr.mxu0 0.0
    %272 = vmatpush1.msra.mxu0 0.0
    %273 = vmatprep.subr.mxu0 0.0
    %274 = vmatpush1.msra.mxu0 0.0
    %275 = vmatprep.subr.mxu0 0.0
    %276 = vmatpush1.msra.mxu0 0.0
    %277 = vmatprep.mubr.f32.mxu0 0.0
    %278 = vmatmul.mubr.f32.gmra.mrb[0].mxu0 %v208
    %v279 = vpop.f32.mrb[0].mxu0
    %v280 = vadd.f32 %v206, %v279
    %v281 = vpop.f32.mrb[0].mxu0
    %282 = vmatprep.mubr.f32.mxu0 0.0
    %283 = vmatmul.mubr.f32.gmra.mrb[0].mxu0 %v211
    %v284 = vpop.f32.mrb[0].mxu0
    %v285 = vadd.f32 %v206, %v284
    %v286 = vpop.f32.mrb[0].mxu0
    %287 = vdwg.mxu0
    %v288 = vld [vmem:[#allocation6 + $0x1] sm:$0x1]
    %v289 = vld [vmem:[#allocation6 + $0x2] sm:$0x1]
    %v290 = vsel %vm156, %v280, 0.0
    %291 = vadd.xlane.f32.xlu0 %v290
    %v292 = vpop.xlane.xlu0 %291
    %v293 = vsel %vm156, %v285, 0.0
    %294 = vadd.xlane.f32.xlu0 %v293
    %v295 = vpop.xlane.xlu0 %294
    %v296 = vmul.f32 %v292, %v163
    %v297 = vmul.f32 %v295, %v163
    %v298 = vsub.f32 %v280, %v296
    %v299 = vsub.f32 %v285, %v297
    %v300 = vmul.f32 %v298, %v298
    %v301 = vmul.f32 %v299, %v299
    %v302 = vsel %vm156, %v300, 0.0
    %303 = vadd.xlane.f32.xlu0 %v302
    %v304 = vpop.xlane.xlu0 %303
    %v305 = vsel %vm156, %v301, 0.0
    %306 = vadd.xlane.f32.xlu0 %v305
    %v307 = vpop.xlane.xlu0 %306
    %v308 = vmul.f32 %v304, %v163
    %v309 = vmul.f32 %v307, %v163
    %v310 = vadd.f32 %v308, 1e-05
    %v311 = vadd.f32 %v309, 1e-05
    %v312 = vrsqrt.pop %v310
    %v313 = vrsqrt.pop %v311
    %v314 = vmul.f32 %v298, %v312
    %v315 = vmul.f32 %v299, %v313
    %v316 = vlaneseq
    %v317 = vshrl.u32 %v316, 7
    %v318 = vsub.s32 0, %v317
    %v319 = vrot.slane %v288, %v318
    %v320 = vmul.f32 %v314, %v319
    %v321 = vmul.f32 %v315, %v319
    %v322 = vlaneseq
    %v323 = vshrl.u32 %v322, 7
    %v324 = vsub.s32 0, %v323
    %v325 = vrot.slane %v289, %v324
    %v326 = vadd.f32 %v320, %v325
    %v327 = vadd.f32 %v321, %v325
    %v328 = vmax.f32 %v326, 0.0
    %v329 = vmax.f32 %v327, 0.0
    %v330 = vld [vmem:[%s5] sm:$0xff]
    %v331 = vld [vmem:[%s5 + $0x8] sm:$0xff]
    %v332 = vld [vmem:[%s5 + $0x10] sm:$0xff]
    %v333 = vld [vmem:[%s5 + $0x18] sm:$0xff]
    %v334 = vld [vmem:[%s6] sm:$0x1]
    %v336 = vlaneseq
    %v337 = vshrl.u32 %v336, 7
    %v338 = vsub.s32 0, %v337
    %v339 = vrot.slane %v334, %v338
    %v342 = vsel %vm156, %v328, 0
    %v345 = vsel %vm156, %v329, 0
    %347 = vmatprep.subr.mxu0 0.0
    %348 = vmatpush1.msra.mxu0 %v330
    %349 = vmatprep.subr.mxu0 0.0
    %350 = vmatpush1.msra.mxu0 %v331
    %351 = vmatprep.subr.mxu0 0.0
    %352 = vmatpush1.msra.mxu0 %v332
    %353 = vmatprep.subr.mxu0 0.0
    %354 = vmatpush1.msra.mxu0 %v333
    %355 = vmatprep.subr.mxu0 0.0
    %356 = vmatpush1.msra.mxu0 0.0
    %357 = vmatprep.subr.mxu0 0.0
    %358 = vmatpush1.msra.mxu0 0.0
    %359 = vmatprep.subr.mxu0 0.0
    %360 = vmatpush1.msra.mxu0 0.0
    %361 = vmatprep.subr.mxu0 0.0
    %362 = vmatpush1.msra.mxu0 0.0
    %363 = vmatprep.subr.mxu0 0.0
    %364 = vmatpush1.msra.mxu0 0.0
    %365 = vmatprep.subr.mxu0 0.0
    %366 = vmatpush1.msra.mxu0 0.0
    %367 = vmatprep.subr.mxu0 0.0
    %368 = vmatpush1.msra.mxu0 0.0
    %369 = vmatprep.subr.mxu0 0.0
    %370 = vmatpush1.msra.mxu0 0.0
    %371 = vmatprep.subr.mxu0 0.0
    %372 = vmatpush1.msra.mxu0 0.0
    %373 = vmatprep.subr.mxu0 0.0
    %374 = vmatpush1.msra.mxu0 0.0
    %375 = vmatprep.subr.mxu0 0.0
    %376 = vmatpush1.msra.mxu0 0.0
    %377 = vmatprep.subr.mxu0 0.0
    %378 = vmatpush1.msra.mxu0 0.0
    %379 = vmatprep.subr.mxu0 0.0
    %380 = vmatpush1.msra.mxu0 0.0
    %381 = vmatprep.subr.mxu0 0.0
    %382 = vmatpush1.msra.mxu0 0.0
    %383 = vmatprep.subr.mxu0 0.0
    %384 = vmatpush1.msra.mxu0 0.0
    %385 = vmatprep.subr.mxu0 0.0
    %386 = vmatpush1.msra.mxu0 0.0
    %387 = vmatprep.subr.mxu0 0.0
    %388 = vmatpush1.msra.mxu0 0.0
    %389 = vmatprep.subr.mxu0 0.0
    %390 = vmatpush1.msra.mxu0 0.0
    %391 = vmatprep.subr.mxu0 0.0
    %392 = vmatpush1.msra.mxu0 0.0
    %393 = vmatprep.subr.mxu0 0.0
    %394 = vmatpush1.msra.mxu0 0.0
    %395 = vmatprep.subr.mxu0 0.0
    %396 = vmatpush1.msra.mxu0 0.0
    %397 = vmatprep.subr.mxu0 0.0
    %398 = vmatpush1.msra.mxu0 0.0
    %399 = vmatprep.subr.mxu0 0.0
    %400 = vmatpush1.msra.mxu0 0.0
    %401 = vmatprep.subr.mxu0 0.0
    %402 = vmatpush1.msra.mxu0 0.0
    %403 = vmatprep.subr.mxu0 0.0
    %404 = vmatpush1.msra.mxu0 0.0
    %405 = vmatprep.subr.mxu0 0.0
    %406 = vmatpush1.msra.mxu0 0.0
    %407 = vmatprep.subr.mxu0 0.0
    %408 = vmatpush1.msra.mxu0 0.0
    %409 = vmatprep.subr.mxu0 0.0
    %410 = vmatpush1.msra.mxu0 0.0
    %411 = vmatprep.mubr.f32.mxu0 0.0
    %412 = vmatmul.mubr.f32.gmra.mrb[0].mxu0 %v342
    %v413 = vpop.f32.mrb[0].mxu0
    %v414 = vadd.f32 %v339, %v413
    %v415 = vpop.f32.mrb[0].mxu0
    %416 = vmatprep.mubr.f32.mxu0 0.0
    %417 = vmatmul.mubr.f32.gmra.mrb[0].mxu0 %v345
    %v418 = vpop.f32.mrb[0].mxu0
    %v419 = vadd.f32 %v339, %v418
    %v420 = vpop.f32.mrb[0].mxu0
    %421 = vdwg.mxu0
    %vm422 = vcmask 64512
    %423 = vst.msk [vmem:[%s7] sm:$0xff] %vm422, %v414
    %424 = vst.msk [vmem:[%s7 + $0x8] sm:$0xff] %vm422, %v419
    // Predicated region
    $region42: #{tpu_custom_call.1} parent=1 // pred_check
      _
    $region43: #{tpu_custom_call.1} parent=1 // pred_check_branch
      %426 = sbr.rel (0) target = $region45
    $region44: #{tpu_custom_call.1} parent=1 // pred_region
      _
    $region45: #{tpu_custom_call.1} parent=1 // pred_fallthru
      _
    // Predicated region
    $region46: #{tpu_custom_call.1} parent=1 // pred_check
      _
    $region47: #{tpu_custom_call.1} parent=1 // pred_check_branch
      %428 = sbr.rel (0) target = $region49
    $region48: #{tpu_custom_call.1} parent=1 // pred_region
      _
    $region49: #{tpu_custom_call.1} parent=1 // pred_fallthru
      _
    %429 = vsyncpa [#allocation3], 1
    %430 = vsyncpa [#allocation5], 1

</llo_original>
